<compile_context>
chip_gen: v5e
topology: v5e:2x2
jax: 0.10.0
libtpu: 0.0.40
codegen_flags: <defaults>
</compile_context>

<pallas_src>
import functools

import jax
import jax.numpy as jnp
import numpy as np
from jax import lax
from jax.experimental import pallas as pl
from jax.experimental.pallas import tpu as pltpu


# ----------------------------------------------------------------------------
# Fused kernel: one grid step == one image.
# ----------------------------------------------------------------------------
def _bdp_fused_kernel(x_ref, xs_ref, wexp_ref, bexp_ref, b3_ref, sb_ref, o_ref, ypad_ref,
                      *, H, W, Hs, Ws, Cin, Cout, off_top, off_left):
    # ---------------- Stage A: ConvTranspose2d(k=2, s=2) == one MXU matmul --------------
    # x_ref[0]: (H, W*Cin) row-flat NHWC.  wexp columns are ordered (ki, j, kj, co), so
    # result row i already holds upsampled row 2i in its first half of the lanes and row
    # 2i+1 in its second half, each in lane-flat (width, channel) order -> no interleave
    # transpose / reshape is ever needed.
    u = jnp.dot(x_ref[0], wexp_ref[...], preferred_element_type=jnp.float32) + bexp_ref[...]
    u_even = u[:, : 2 * W * Cin]          # upsampled rows 2i,   (H, 2W*Cin)
    u_odd = u[:, 2 * W * Cin:]            # upsampled rows 2i+1, (H, 2W*Cin)

    # ---------------- Stage B: build halo-padded conv input in VMEM scratch -------------
    # ypad layout: (padded_row, (padded_width, channel)).  Zero halo (3x3 conv pad=1) and
    # pad-to-skip border, upsample written row-by-row (2H tiny contiguous stores, unrolled
    # at trace time), then the skip connection added in one wide read-modify-write.
    ypad_ref[...] = jnp.zeros_like(ypad_ref)
    c0 = (1 + off_left) * Cin
    cw = 2 * W * Cin
    for i in range(H):
        r = 1 + off_top + 2 * i
        ypad_ref[r:r + 1, c0:c0 + cw] = u_even[i:i + 1, :]
        ypad_ref[r + 1:r + 2, c0:c0 + cw] = u_odd[i:i + 1, :]
    ypad_ref[1:1 + Hs, Cin:Cin + Ws * Cin] = (
        ypad_ref[1:1 + Hs, Cin:Cin + Ws * Cin] + xs_ref[0])

    # ---------------- Stage C: 3x3 conv + BatchNorm(eval) + ReLU ------------------------
    # Three banded matmuls (one per kh), K = (Ws+2)*Cin; the kw taps live in the band
    # structure of b3, so the accumulator is produced directly in the lane-dense
    # (Hs, Ws*Cout) layout used for the store (Ws*Cout == 128 here -> unmasked vst).
    acc = jnp.dot(ypad_ref[0:Hs, :], b3_ref[0], preferred_element_type=jnp.float32)
    acc = acc + jnp.dot(ypad_ref[1:1 + Hs, :], b3_ref[1], preferred_element_type=jnp.float32)
    acc = acc + jnp.dot(ypad_ref[2:2 + Hs, :], b3_ref[2], preferred_element_type=jnp.float32)
    out = jnp.maximum(acc * sb_ref[0:1, :] + sb_ref[1:2, :], 0.0)
    o_ref[0] = out.astype(o_ref.dtype)


# ----------------------------------------------------------------------------
# BDPBlock forward (public API: NCHW in / NCHW out, matching the PyTorch module)
# ----------------------------------------------------------------------------
def bdp_block_forward(x_skip_nchw, x_nchw, params):
    wt, bt = params["wt"], params["bt"]          # ConvTranspose2d: (Cin, Cin, 2, 2), (Cin,)
    wc, bc = params["wc"], params["bc"]          # Conv2d:          (Cout, Cin, 3, 3), (Cout,)
    gamma, beta = params["gamma"], params["beta"]
    rmean, rvar = params["rmean"], params["rvar"]
    eps = 1e-5

    N, Cin, H, W = x_nchw.shape
    _, _, Hs, Ws = x_skip_nchw.shape
    Cout = wc.shape[0]

    # pad-to-skip offsets -- mirrors the PyTorch F.pad argument order verbatim: the last
    # dim (W) is padded with the h_pad split and the second-to-last (H) with the w_pad
    # split.  (Only consistent when h_pad == w_pad; otherwise PyTorch itself shape-errors.)
    h_pad = Hs - 2 * H
    w_pad = Ws - 2 * W
    assert 2 * H + w_pad == Hs and 2 * W + h_pad == Ws, \
        "asymmetric pad would shape-mismatch in `x_skip + x`, exactly as in PyTorch"
    off_top, off_left = w_pad // 2, h_pad // 2

    # ---- host-side (XLA) one-off weight packing -----------------------------------------
    # ConvTranspose2d(k=2,s=2) as ONE matmul: Xf (H, W*Cin) @ wexp (W*Cin, 4*W*Cin).
    # wexp is block-diagonal over the input column j, output columns ordered (ki, j, kj, co).
    eye_w = jnp.eye(W, dtype=jnp.float32)
    blocks = []
    for ki in range(2):
        a_ki = jnp.transpose(wt[:, :, ki, :], (0, 2, 1)).reshape(Cin, 2 * Cin)  # (ci, kj*Cin+co)
        blocks.append(jnp.einsum("jJ,cd->jcJd", eye_w, a_ki).reshape(W * Cin, 2 * W * Cin))
    wexp = jnp.concatenate(blocks, axis=1)                       # (W*Cin, 4*W*Cin)
    bexp = jnp.tile(bt, 4 * W).reshape(1, 4 * W * Cin)

    # Conv2d(3x3, pad=1) as 3 banded matmuls: b3[kh] has the kw taps on its band structure,
    # mapping the lane-flat padded row (Ws+2)*Cin directly to the lane-flat output Ws*Cout.
    b_list = []
    for kh in range(3):
        bkh = jnp.zeros(((Ws + 2) * Cin, Ws * Cout), jnp.float32)
        for kw in range(3):
            shift = jnp.eye(Ws + 2, Ws, k=-kw, dtype=jnp.float32)   # [w', w] = (w' == w + kw)
            a = jnp.transpose(wc[:, :, kh, kw])                     # (Cin, Cout)
            bkh = bkh + jnp.einsum("wv,cd->wcvd", shift, a).reshape((Ws + 2) * Cin, Ws * Cout)
        b_list.append(bkh)
    b3 = jnp.stack(b_list, axis=0)                                  # (3, (Ws+2)*Cin, Ws*Cout)

    # BatchNorm(eval) folded with the conv bias into per-lane scale / bias.
    scale = gamma / jnp.sqrt(rvar + eps)
    bias = (bc - rmean) * scale + beta
    sb = jnp.stack([jnp.tile(scale, Ws), jnp.tile(bias, Ws)], axis=0)   # (2, Ws*Cout)

    # ---- activations: NCHW -> lane-flat NHWC slabs (one transpose each at the API edge) ----
    x_flat = jnp.transpose(x_nchw, (0, 2, 3, 1)).reshape(N, H, W * Cin)
    xs_flat = jnp.transpose(x_skip_nchw, (0, 2, 3, 1)).reshape(N, Hs, Ws * Cin)

    kernel = functools.partial(_bdp_fused_kernel, H=H, W=W, Hs=Hs, Ws=Ws, Cin=Cin,
                               Cout=Cout, off_top=off_top, off_left=off_left)

    out_flat = pl.pallas_call(
        kernel,
        out_shape=jax.ShapeDtypeStruct((N, Hs, Ws * Cout), jnp.float32),
        grid=(N,),
        in_specs=[
            pl.BlockSpec((1, H, W * Cin), lambda n: (n, 0, 0)),
            pl.BlockSpec((1, Hs, Ws * Cin), lambda n: (n, 0, 0)),
            pl.BlockSpec((W * Cin, 4 * W * Cin), lambda n: (0, 0)),
            pl.BlockSpec((1, 4 * W * Cin), lambda n: (0, 0)),
            pl.BlockSpec((3, (Ws + 2) * Cin, Ws * Cout), lambda n: (0, 0, 0)),
            pl.BlockSpec((2, Ws * Cout), lambda n: (0, 0)),
        ],
        out_specs=pl.BlockSpec((1, Hs, Ws * Cout), lambda n: (n, 0, 0)),
        scratch_shapes=[pltpu.VMEM((Hs + 2, (Ws + 2) * Cin), jnp.float32)],
        compiler_params=pltpu.CompilerParams(dimension_semantics=("parallel",)),
    )(x_flat, xs_flat, wexp, bexp, b3, sb)

    # free contiguous reshape + one NHWC -> NCHW transpose at the API edge
    return jnp.transpose(out_flat.reshape(N, Hs, Ws, Cout), (0, 3, 1, 2))


# ----------------------------------------------------------------------------
# Pure-JAX reference (NCHW, mirrors PyTorch semantics) for verification.
# ----------------------------------------------------------------------------
def bdp_block_reference(x_skip, x, params):
    wt, bt, wc, bc = params["wt"], params["bt"], params["wc"], params["bc"]
    gamma, beta, rmean, rvar = params["gamma"], params["beta"], params["rmean"], params["rvar"]
    N, Cin, H, W = x.shape
    up = jnp.zeros((N, Cin, 2 * H, 2 * W), x.dtype)
    for ki in range(2):
        for kj in range(2):
            contrib = jnp.einsum("nchw,cd->ndhw", x, wt[:, :, ki, kj])
            up = up.at[:, :, ki::2, kj::2].set(contrib + bt[None, :, None, None])
    h_pad = x_skip.shape[2] - up.shape[2]
    w_pad = x_skip.shape[3] - up.shape[3]
    up = jnp.pad(up, ((0, 0), (0, 0),
                      (w_pad // 2, w_pad - w_pad // 2),
                      (h_pad // 2, h_pad - h_pad // 2)))
    y = x_skip + up
    conv = lax.conv_general_dilated(y, wc, (1, 1), ((1, 1), (1, 1)),
                                    dimension_numbers=("NCHW", "OIHW", "NCHW"))
    conv = conv + bc[None, :, None, None]
    scale = gamma / jnp.sqrt(rvar + 1e-5)
    bn = (conv - rmean[None, :, None, None]) * scale[None, :, None, None] + beta[None, :, None, None]
    return jnp.maximum(bn, 0.0)


if __name__ == "__main__":
    key = jax.random.PRNGKey(0)
    ks = jax.random.split(key, 6)

    N, Cin, Cout, H, W = 2, 4, 8, 8, 8           # x: (2,4,8,8), x_skip: (2,4,16,16)
    x = jax.random.normal(ks[0], (N, Cin, H, W), jnp.float32)
    x_skip = jax.random.normal(ks[1], (N, Cin, 2 * H, 2 * W), jnp.float32)

    params = {
        "wt": 0.2 * jax.random.normal(ks[2], (Cin, Cin, 2, 2), jnp.float32),
        "bt": 0.1 * jax.random.normal(ks[3], (Cin,), jnp.float32),
        "wc": 0.2 * jax.random.normal(ks[4], (Cout, Cin, 3, 3), jnp.float32),
        "bc": 0.1 * jax.random.normal(ks[5], (Cout,), jnp.float32),
        "gamma": jnp.ones((Cout,), jnp.float32),
        "beta": jnp.zeros((Cout,), jnp.float32),
        "rmean": jnp.zeros((Cout,), jnp.float32),
        "rvar": jnp.ones((Cout,), jnp.float32),
    }

    fwd = jax.jit(bdp_block_forward)
    out = jax.block_until_ready(fwd(x_skip, x, params))

    ref = bdp_block_reference(x_skip, x, params)
    np.testing.assert_allclose(np.asarray(out), np.asarray(ref), rtol=1e-4, atol=1e-4)

    print("KERNEL_OK")
</pallas_src>

<mosaic_0001>
module attributes {stable_mosaic.version = 11 : i64} {
  func.func @_bdp_fused_kernel(%arg0: i32, %arg1: memref<1x8x32xf32, #tpu.memory_space<vmem>>, %arg2: memref<1x16x64xf32, #tpu.memory_space<vmem>>, %arg3: memref<32x128xf32, #tpu.memory_space<vmem>>, %arg4: memref<1x128xf32, #tpu.memory_space<vmem>>, %arg5: memref<3x72x128xf32, #tpu.memory_space<vmem>>, %arg6: memref<2x128xf32, #tpu.memory_space<vmem>>, %arg7: memref<1x16x128xf32, #tpu.memory_space<vmem>>, %arg8: memref<18x72xf32, #tpu.memory_space<vmem>>) attributes {dimension_semantics = [#tpu.dimension_semantics<parallel>], iteration_bounds = array<i64: 2>, scalar_prefetch = 0 : i64, scratch_operands = 1 : i64, tpu.core_type = #tpu.core_type<tc>, window_params = [{transform_indices = @transform_0, window_bounds = array<i64: 1, 8, 32>}, {transform_indices = @transform_1, window_bounds = array<i64: 1, 16, 64>}, {pipeline_mode = #tpu.pipeline_mode<synchronous>, transform_indices = @transform_2, window_bounds = array<i64: 32, 128>}, {pipeline_mode = #tpu.pipeline_mode<synchronous>, transform_indices = @transform_3, window_bounds = array<i64: 1, 128>}, {pipeline_mode = #tpu.pipeline_mode<synchronous>, transform_indices = @transform_4, window_bounds = array<i64: 3, 72, 128>}, {pipeline_mode = #tpu.pipeline_mode<synchronous>, transform_indices = @transform_5, window_bounds = array<i64: 2, 128>}, {transform_indices = @transform_6, window_bounds = array<i64: 1, 16, 128>}]} {
    %c0 = arith.constant 0 : index
    %c0_0 = arith.constant 0 : index
    %c0_1 = arith.constant 0 : index
    %0 = vector.load %arg1[%c0, %c0_0, %c0_1] : memref<1x8x32xf32, #tpu.memory_space<vmem>>, vector<1x8x32xf32>
    %1 = vector.shape_cast %0 : vector<1x8x32xf32> to vector<8x32xf32>
    %c0_2 = arith.constant 0 : index
    %c0_3 = arith.constant 0 : index
    %2 = vector.load %arg3[%c0_2, %c0_3] : memref<32x128xf32, #tpu.memory_space<vmem>>, vector<32x128xf32>
    %cst = arith.constant dense<0.000000e+00> : vector<8x128xf32>
    %3 = tpu.matmul %1, %2, %cst {dimension_numbers = #tpu.dot_dimension_numbers<[1], [0], [0], [1], [0, 0, 1, 1], [], []>} : vector<8x32xf32>, vector<32x128xf32>, vector<8x128xf32> -> vector<8x128xf32>
    %c0_4 = arith.constant 0 : index
    %c0_5 = arith.constant 0 : index
    %4 = vector.load %arg4[%c0_4, %c0_5] : memref<1x128xf32, #tpu.memory_space<vmem>>, vector<1x128xf32>
    %5 = vector.broadcast %4 : vector<1x128xf32> to vector<8x128xf32>
    %6 = arith.addf %3, %5 : vector<8x128xf32>
    %7 = vector.extract_strided_slice %6 {offsets = [0, 0], sizes = [8, 64], strides = [1, 1]} : vector<8x128xf32> to vector<8x64xf32>
    %8 = vector.extract_strided_slice %6 {offsets = [0, 64], sizes = [8, 64], strides = [1, 1]} : vector<8x128xf32> to vector<8x64xf32>
    %cst_6 = arith.constant 0.000000e+00 : f32
    %9 = vector.broadcast %cst_6 : f32 to vector<18x72xf32>
    %c0_7 = arith.constant 0 : index
    %c0_8 = arith.constant 0 : index
    %10 = vector.load %arg8[%c0_7, %c0_8] : memref<18x72xf32, #tpu.memory_space<vmem>>, vector<18x72xf32>
    tpu.vector_store %arg8[%c0_7, %c0_8], %9 {strides = array<i32>} : memref<18x72xf32, #tpu.memory_space<vmem>>, vector<18x72xf32>,
    %11 = vector.extract_strided_slice %7 {offsets = [0, 0], sizes = [1, 64], strides = [1, 1]} : vector<8x64xf32> to vector<1x64xf32>
    %c1 = arith.constant 1 : index
    %c4 = arith.constant 4 : index
    %12 = vector.load %arg8[%c1, %c4] : memref<18x72xf32, #tpu.memory_space<vmem>>, vector<1x64xf32>
    tpu.vector_store %arg8[%c1, %c4], %11 {strides = array<i32>} : memref<18x72xf32, #tpu.memory_space<vmem>>, vector<1x64xf32>,
    %13 = vector.extract_strided_slice %8 {offsets = [0, 0], sizes = [1, 64], strides = [1, 1]} : vector<8x64xf32> to vector<1x64xf32>
    %c2 = arith.constant 2 : index
    %c4_9 = arith.constant 4 : index
    %14 = vector.load %arg8[%c2, %c4_9] : memref<18x72xf32, #tpu.memory_space<vmem>>, vector<1x64xf32>
    tpu.vector_store %arg8[%c2, %c4_9], %13 {strides = array<i32>} : memref<18x72xf32, #tpu.memory_space<vmem>>, vector<1x64xf32>,
    %15 = vector.extract_strided_slice %7 {offsets = [1, 0], sizes = [1, 64], strides = [1, 1]} : vector<8x64xf32> to vector<1x64xf32>
    %c3 = arith.constant 3 : index
    %c4_10 = arith.constant 4 : index
    %16 = vector.load %arg8[%c3, %c4_10] : memref<18x72xf32, #tpu.memory_space<vmem>>, vector<1x64xf32>
    tpu.vector_store %arg8[%c3, %c4_10], %15 {strides = array<i32>} : memref<18x72xf32, #tpu.memory_space<vmem>>, vector<1x64xf32>,
    %17 = vector.extract_strided_slice %8 {offsets = [1, 0], sizes = [1, 64], strides = [1, 1]} : vector<8x64xf32> to vector<1x64xf32>
    %c4_11 = arith.constant 4 : index
    %c4_12 = arith.constant 4 : index
    %18 = vector.load %arg8[%c4_11, %c4_12] : memref<18x72xf32, #tpu.memory_space<vmem>>, vector<1x64xf32>
    tpu.vector_store %arg8[%c4_11, %c4_12], %17 {strides = array<i32>} : memref<18x72xf32, #tpu.memory_space<vmem>>, vector<1x64xf32>,
    %19 = vector.extract_strided_slice %7 {offsets = [2, 0], sizes = [1, 64], strides = [1, 1]} : vector<8x64xf32> to vector<1x64xf32>
    %c5 = arith.constant 5 : index
    %c4_13 = arith.constant 4 : index
    %20 = vector.load %arg8[%c5, %c4_13] : memref<18x72xf32, #tpu.memory_space<vmem>>, vector<1x64xf32>
    tpu.vector_store %arg8[%c5, %c4_13], %19 {strides = array<i32>} : memref<18x72xf32, #tpu.memory_space<vmem>>, vector<1x64xf32>,
    %21 = vector.extract_strided_slice %8 {offsets = [2, 0], sizes = [1, 64], strides = [1, 1]} : vector<8x64xf32> to vector<1x64xf32>
    %c6 = arith.constant 6 : index
    %c4_14 = arith.constant 4 : index
    %22 = vector.load %arg8[%c6, %c4_14] : memref<18x72xf32, #tpu.memory_space<vmem>>, vector<1x64xf32>
    tpu.vector_store %arg8[%c6, %c4_14], %21 {strides = array<i32>} : memref<18x72xf32, #tpu.memory_space<vmem>>, vector<1x64xf32>,
    %23 = vector.extract_strided_slice %7 {offsets = [3, 0], sizes = [1, 64], strides = [1, 1]} : vector<8x64xf32> to vector<1x64xf32>
    %c7 = arith.constant 7 : index
    %c4_15 = arith.constant 4 : index
    %24 = vector.load %arg8[%c7, %c4_15] : memref<18x72xf32, #tpu.memory_space<vmem>>, vector<1x64xf32>
    tpu.vector_store %arg8[%c7, %c4_15], %23 {strides = array<i32>} : memref<18x72xf32, #tpu.memory_space<vmem>>, vector<1x64xf32>,
    %25 = vector.extract_strided_slice %8 {offsets = [3, 0], sizes = [1, 64], strides = [1, 1]} : vector<8x64xf32> to vector<1x64xf32>
    %c8 = arith.constant 8 : index
    %c4_16 = arith.constant 4 : index
    %26 = vector.load %arg8[%c8, %c4_16] : memref<18x72xf32, #tpu.memory_space<vmem>>, vector<1x64xf32>
    tpu.vector_store %arg8[%c8, %c4_16], %25 {strides = array<i32>} : memref<18x72xf32, #tpu.memory_space<vmem>>, vector<1x64xf32>,
    %27 = vector.extract_strided_slice %7 {offsets = [4, 0], sizes = [1, 64], strides = [1, 1]} : vector<8x64xf32> to vector<1x64xf32>
    %c9 = arith.constant 9 : index
    %c4_17 = arith.constant 4 : index
    %28 = vector.load %arg8[%c9, %c4_17] : memref<18x72xf32, #tpu.memory_space<vmem>>, vector<1x64xf32>
    tpu.vector_store %arg8[%c9, %c4_17], %27 {strides = array<i32>} : memref<18x72xf32, #tpu.memory_space<vmem>>, vector<1x64xf32>,
    %29 = vector.extract_strided_slice %8 {offsets = [4, 0], sizes = [1, 64], strides = [1, 1]} : vector<8x64xf32> to vector<1x64xf32>
    %c10 = arith.constant 10 : index
    %c4_18 = arith.constant 4 : index
    %30 = vector.load %arg8[%c10, %c4_18] : memref<18x72xf32, #tpu.memory_space<vmem>>, vector<1x64xf32>
    tpu.vector_store %arg8[%c10, %c4_18], %29 {strides = array<i32>} : memref<18x72xf32, #tpu.memory_space<vmem>>, vector<1x64xf32>,
    %31 = vector.extract_strided_slice %7 {offsets = [5, 0], sizes = [1, 64], strides = [1, 1]} : vector<8x64xf32> to vector<1x64xf32>
    %c11 = arith.constant 11 : index
    %c4_19 = arith.constant 4 : index
    %32 = vector.load %arg8[%c11, %c4_19] : memref<18x72xf32, #tpu.memory_space<vmem>>, vector<1x64xf32>
    tpu.vector_store %arg8[%c11, %c4_19], %31 {strides = array<i32>} : memref<18x72xf32, #tpu.memory_space<vmem>>, vector<1x64xf32>,
    %33 = vector.extract_strided_slice %8 {offsets = [5, 0], sizes = [1, 64], strides = [1, 1]} : vector<8x64xf32> to vector<1x64xf32>
    %c12 = arith.constant 12 : index
    %c4_20 = arith.constant 4 : index
    %34 = vector.load %arg8[%c12, %c4_20] : memref<18x72xf32, #tpu.memory_space<vmem>>, vector<1x64xf32>
    tpu.vector_store %arg8[%c12, %c4_20], %33 {strides = array<i32>} : memref<18x72xf32, #tpu.memory_space<vmem>>, vector<1x64xf32>,
    %35 = vector.extract_strided_slice %7 {offsets = [6, 0], sizes = [1, 64], strides = [1, 1]} : vector<8x64xf32> to vector<1x64xf32>
    %c13 = arith.constant 13 : index
    %c4_21 = arith.constant 4 : index
    %36 = vector.load %arg8[%c13, %c4_21] : memref<18x72xf32, #tpu.memory_space<vmem>>, vector<1x64xf32>
    tpu.vector_store %arg8[%c13, %c4_21], %35 {strides = array<i32>} : memref<18x72xf32, #tpu.memory_space<vmem>>, vector<1x64xf32>,
    %37 = vector.extract_strided_slice %8 {offsets = [6, 0], sizes = [1, 64], strides = [1, 1]} : vector<8x64xf32> to vector<1x64xf32>
    %c14 = arith.constant 14 : index
    %c4_22 = arith.constant 4 : index
    %38 = vector.load %arg8[%c14, %c4_22] : memref<18x72xf32, #tpu.memory_space<vmem>>, vector<1x64xf32>
    tpu.vector_store %arg8[%c14, %c4_22], %37 {strides = array<i32>} : memref<18x72xf32, #tpu.memory_space<vmem>>, vector<1x64xf32>,
    %39 = vector.extract_strided_slice %7 {offsets = [7, 0], sizes = [1, 64], strides = [1, 1]} : vector<8x64xf32> to vector<1x64xf32>
    %c15 = arith.constant 15 : index
    %c4_23 = arith.constant 4 : index
    %40 = vector.load %arg8[%c15, %c4_23] : memref<18x72xf32, #tpu.memory_space<vmem>>, vector<1x64xf32>
    tpu.vector_store %arg8[%c15, %c4_23], %39 {strides = array<i32>} : memref<18x72xf32, #tpu.memory_space<vmem>>, vector<1x64xf32>,
    %41 = vector.extract_strided_slice %8 {offsets = [7, 0], sizes = [1, 64], strides = [1, 1]} : vector<8x64xf32> to vector<1x64xf32>
    %c16 = arith.constant 16 : index
    %c4_24 = arith.constant 4 : index
    %42 = vector.load %arg8[%c16, %c4_24] : memref<18x72xf32, #tpu.memory_space<vmem>>, vector<1x64xf32>
    tpu.vector_store %arg8[%c16, %c4_24], %41 {strides = array<i32>} : memref<18x72xf32, #tpu.memory_space<vmem>>, vector<1x64xf32>,
    %c1_25 = arith.constant 1 : index
    %c4_26 = arith.constant 4 : index
    %43 = vector.load %arg8[%c1_25, %c4_26] : memref<18x72xf32, #tpu.memory_space<vmem>>, vector<16x64xf32>
    %c0_27 = arith.constant 0 : index
    %c0_28 = arith.constant 0 : index
    %c0_29 = arith.constant 0 : index
    %44 = vector.load %arg2[%c0_27, %c0_28, %c0_29] : memref<1x16x64xf32, #tpu.memory_space<vmem>>, vector<1x16x64xf32>
    %45 = vector.shape_cast %44 : vector<1x16x64xf32> to vector<16x64xf32>
    %46 = arith.addf %43, %45 : vector<16x64xf32>
    %c1_30 = arith.constant 1 : index
    %c4_31 = arith.constant 4 : index
    %47 = vector.load %arg8[%c1_30, %c4_31] : memref<18x72xf32, #tpu.memory_space<vmem>>, vector<16x64xf32>
    tpu.vector_store %arg8[%c1_30, %c4_31], %46 {strides = array<i32>} : memref<18x72xf32, #tpu.memory_space<vmem>>, vector<16x64xf32>,
    %c0_32 = arith.constant 0 : index
    %c0_33 = arith.constant 0 : index
    %48 = vector.load %arg8[%c0_32, %c0_33] : memref<18x72xf32, #tpu.memory_space<vmem>>, vector<16x72xf32>
    %c0_34 = arith.constant 0 : index
    %c0_35 = arith.constant 0 : index
    %c0_36 = arith.constant 0 : index
    %49 = vector.load %arg5[%c0_34, %c0_35, %c0_36] : memref<3x72x128xf32, #tpu.memory_space<vmem>>, vector<1x72x128xf32>
    %50 = vector.shape_cast %49 : vector<1x72x128xf32> to vector<72x128xf32>
    %cst_37 = arith.constant dense<0.000000e+00> : vector<16x128xf32>
    %51 = tpu.matmul %48, %50, %cst_37 {dimension_numbers = #tpu.dot_dimension_numbers<[1], [0], [0], [1], [0, 0, 1, 1], [], []>} : vector<16x72xf32>, vector<72x128xf32>, vector<16x128xf32> -> vector<16x128xf32>
    %c1_38 = arith.constant 1 : index
    %c0_39 = arith.constant 0 : index
    %52 = vector.load %arg8[%c1_38, %c0_39] : memref<18x72xf32, #tpu.memory_space<vmem>>, vector<16x72xf32>
    %c1_40 = arith.constant 1 : index
    %c0_41 = arith.constant 0 : index
    %c0_42 = arith.constant 0 : index
    %53 = vector.load %arg5[%c1_40, %c0_41, %c0_42] : memref<3x72x128xf32, #tpu.memory_space<vmem>>, vector<1x72x128xf32>
    %54 = vector.shape_cast %53 : vector<1x72x128xf32> to vector<72x128xf32>
    %cst_43 = arith.constant dense<0.000000e+00> : vector<16x128xf32>
    %55 = tpu.matmul %52, %54, %cst_43 {dimension_numbers = #tpu.dot_dimension_numbers<[1], [0], [0], [1], [0, 0, 1, 1], [], []>} : vector<16x72xf32>, vector<72x128xf32>, vector<16x128xf32> -> vector<16x128xf32>
    %56 = arith.addf %51, %55 : vector<16x128xf32>
    %c2_44 = arith.constant 2 : index
    %c0_45 = arith.constant 0 : index
    %57 = vector.load %arg8[%c2_44, %c0_45] : memref<18x72xf32, #tpu.memory_space<vmem>>, vector<16x72xf32>
    %c2_46 = arith.constant 2 : index
    %c0_47 = arith.constant 0 : index
    %c0_48 = arith.constant 0 : index
    %58 = vector.load %arg5[%c2_46, %c0_47, %c0_48] : memref<3x72x128xf32, #tpu.memory_space<vmem>>, vector<1x72x128xf32>
    %59 = vector.shape_cast %58 : vector<1x72x128xf32> to vector<72x128xf32>
    %cst_49 = arith.constant dense<0.000000e+00> : vector<16x128xf32>
    %60 = tpu.matmul %57, %59, %cst_49 {dimension_numbers = #tpu.dot_dimension_numbers<[1], [0], [0], [1], [0, 0, 1, 1], [], []>} : vector<16x72xf32>, vector<72x128xf32>, vector<16x128xf32> -> vector<16x128xf32>
    %61 = arith.addf %56, %60 : vector<16x128xf32>
    %c0_50 = arith.constant 0 : index
    %c0_51 = arith.constant 0 : index
    %62 = vector.load %arg6[%c0_50, %c0_51] : memref<2x128xf32, #tpu.memory_space<vmem>>, vector<1x128xf32>
    %63 = vector.broadcast %62 : vector<1x128xf32> to vector<16x128xf32>
    %64 = arith.mulf %61, %63 : vector<16x128xf32>
    %c1_52 = arith.constant 1 : index
    %c0_53 = arith.constant 0 : index
    %65 = vector.load %arg6[%c1_52, %c0_53] : memref<2x128xf32, #tpu.memory_space<vmem>>, vector<1x128xf32>
    %66 = vector.broadcast %65 : vector<1x128xf32> to vector<16x128xf32>
    %67 = arith.addf %64, %66 : vector<16x128xf32>
    %cst_54 = arith.constant 0.000000e+00 : f32
    %68 = vector.broadcast %cst_54 : f32 to vector<16x128xf32>
    %69 = arith.maximumf %67, %68 : vector<16x128xf32>
    %c0_55 = arith.constant 0 : index
    %c0_56 = arith.constant 0 : index
    %c0_57 = arith.constant 0 : index
    %70 = vector.load %arg7[%c0_55, %c0_56, %c0_57] : memref<1x16x128xf32, #tpu.memory_space<vmem>>, vector<1x16x128xf32>
    %71 = vector.shape_cast %70 : vector<1x16x128xf32> to vector<16x128xf32>
    %72 = vector.shape_cast %69 : vector<16x128xf32> to vector<1x16x128xf32>
    tpu.vector_store %arg7[%c0_55, %c0_56, %c0_57], %72 {strides = array<i32>} : memref<1x16x128xf32, #tpu.memory_space<vmem>>, vector<1x16x128xf32>,
    return
  }
  func.func @transform_0(%arg0: i32) -> (i32, i32, i32) {
    %c0_i32 = arith.constant 0 : i32
    %c0_i32_0 = arith.constant 0 : i32
    %c0_i32_1 = arith.constant 0 : i32
    return %arg0, %c0_i32, %c0_i32_0 : i32, i32, i32
  }
  func.func @transform_1(%arg0: i32) -> (i32, i32, i32) {
    %c0_i32 = arith.constant 0 : i32
    %c0_i32_0 = arith.constant 0 : i32
    %c0_i32_1 = arith.constant 0 : i32
    return %arg0, %c0_i32, %c0_i32_0 : i32, i32, i32
  }
  func.func @transform_2(%arg0: i32) -> (i32, i32) {
    %c0_i32 = arith.constant 0 : i32
    %c0_i32_0 = arith.constant 0 : i32
    %c0_i32_1 = arith.constant 0 : i32
    return %c0_i32, %c0_i32_0 : i32, i32
  }
  func.func @transform_3(%arg0: i32) -> (i32, i32) {
    %c0_i32 = arith.constant 0 : i32
    %c0_i32_0 = arith.constant 0 : i32
    %c0_i32_1 = arith.constant 0 : i32
    return %c0_i32, %c0_i32_0 : i32, i32
  }
  func.func @transform_4(%arg0: i32) -> (i32, i32, i32) {
    %c0_i32 = arith.constant 0 : i32
    %c0_i32_0 = arith.constant 0 : i32
    %c0_i32_1 = arith.constant 0 : i32
    %c0_i32_2 = arith.constant 0 : i32
    return %c0_i32, %c0_i32_0, %c0_i32_1 : i32, i32, i32
  }
  func.func @transform_5(%arg0: i32) -> (i32, i32) {
    %c0_i32 = arith.constant 0 : i32
    %c0_i32_0 = arith.constant 0 : i32
    %c0_i32_1 = arith.constant 0 : i32
    return %c0_i32, %c0_i32_0 : i32, i32
  }
  func.func @transform_6(%arg0: i32) -> (i32, i32, i32) {
    %c0_i32 = arith.constant 0 : i32
    %c0_i32_0 = arith.constant 0 : i32
    %c0_i32_1 = arith.constant 0 : i32
    return %arg0, %c0_i32, %c0_i32_0 : i32, i32, i32
  }
}

</mosaic_0001>

<llo_original>
// kernel: tile.23
$region0: #{tile.23}
  #allocation0 [shape = 's32[1]{0}', space=sflag, size = 0x4, scoped, tag = 'scoped memory for tile.23']
  %s0 = inlined_call_operand.vmem [shape: f32[8], index: 0, kind: input, shape index: {}]
  %s1 = inlined_call_operand.vmem [shape: f32[16,8], index: 1, kind: output, shape index: {}]
  // Predicated region
  $region2: #{tile.23} parent=0 // pred_check
    _
  $region3: #{tile.23} parent=0 // pred_check_branch
    %3 = sbr.rel (0) target = $region5
  $region4: #{tile.23} parent=0 // pred_region
    _
  $region5: #{tile.23} parent=0 // pred_fallthru
    _
  %v4 = vld [vmem:[%s0] ss:$0 sm:$0xff]
  %5 = vst [vmem:[%s1] sm:$0xff] %v4
  %s6 = scalar_lea.vmem %s1, 8
  %7 = vst [vmem:[%s6] sm:$0xff] %v4

// kernel: tile.28
$region0: #{tile.28}
  %s0 = inlined_call_operand.vmem [shape: f32[16,8], index: 0, kind: input, shape index: {}]
  %s1 = inlined_call_operand.vmem [shape: f32[1,128], index: 1, kind: output, shape index: {}]
  $region1: #{tile.28} parent=0
    #allocation0 [shape = 'u8[4096]{0}', space=vmem, size = 0x1000, scoped, tag = 'scoped mem for output reshape']
    %v2 = vld [vmem:[%s0] sm:$0x1]
    %vm3 = vcmask 64512
    %4 = vst.msk [vmem:[#allocation0] sm:$0x1] %vm3, %v2
    %s5 = scalar_lea.vmem %s0, 15
    %v6 = vld [vmem:[%s5] sm:$0x1]
    %7 = vrot.lane.b32.xlu0 %v6, 120
    %v8 = vpop.permute.xlu0 %7
    %vm9 = vcmask 1048512
    %10 = vst.msk [vmem:[#allocation0] sm:$0x1] %vm9, %v8
    %s11 = scalar_lea.vmem %s0, 14
    %v12 = vld [vmem:[%s11] sm:$0x1]
    %13 = vrot.lane.b32.xlu0 %v12, 112
    %v14 = vpop.permute.xlu0 %13
    %vm15 = vcmask 982912
    %16 = vst.msk [vmem:[#allocation0] sm:$0x1] %vm15, %v14
    %s17 = scalar_lea.vmem %s0, 13
    %v18 = vld [vmem:[%s17] sm:$0x1]
    %19 = vrot.lane.b32.xlu0 %v18, 104
    %v20 = vpop.permute.xlu0 %19
    %vm21 = vcmask 917312
    %22 = vst.msk [vmem:[#allocation0] sm:$0x1] %vm21, %v20
    %s23 = scalar_lea.vmem %s0, 12
    %v24 = vld [vmem:[%s23] sm:$0x1]
    %25 = vrot.lane.b32.xlu0 %v24, 96
    %v26 = vpop.permute.xlu0 %25
    %vm27 = vcmask 851712
    %28 = vst.msk [vmem:[#allocation0] sm:$0x1] %vm27, %v26
    %s29 = scalar_lea.vmem %s0, 11
    %v30 = vld [vmem:[%s29] sm:$0x1]
    %31 = vrot.lane.b32.xlu0 %v30, 88
    %v32 = vpop.permute.xlu0 %31
    %vm33 = vcmask 786112
    %34 = vst.msk [vmem:[#allocation0] sm:$0x1] %vm33, %v32
    %s35 = scalar_lea.vmem %s0, 10
    %v36 = vld [vmem:[%s35] sm:$0x1]
    %37 = vrot.lane.b32.xlu0 %v36, 80
    %v38 = vpop.permute.xlu0 %37
    %vm39 = vcmask 720512
    %40 = vst.msk [vmem:[#allocation0] sm:$0x1] %vm39, %v38
    %s41 = scalar_lea.vmem %s0, 9
    %v42 = vld [vmem:[%s41] sm:$0x1]
    %43 = vrot.lane.b32.xlu0 %v42, 72
    %v44 = vpop.permute.xlu0 %43
    %vm45 = vcmask 654912
    %46 = vst.msk [vmem:[#allocation0] sm:$0x1] %vm45, %v44
    %s47 = scalar_lea.vmem %s0, 8
    %v48 = vld [vmem:[%s47] sm:$0x1]
    %49 = vrot.lane.b32.xlu0 %v48, 64
    %v50 = vpop.permute.xlu0 %49
    %vm51 = vcmask 589312
    %52 = vst.msk [vmem:[#allocation0] sm:$0x1] %vm51, %v50
    %s53 = scalar_lea.vmem %s0, 7
    %v54 = vld [vmem:[%s53] sm:$0x1]
    %55 = vrot.lane.b32.xlu0 %v54, 56
    %v56 = vpop.permute.xlu0 %55
    %vm57 = vcmask 523712
    %58 = vst.msk [vmem:[#allocation0] sm:$0x1] %vm57, %v56
    %s59 = scalar_lea.vmem %s0, 6
    %v60 = vld [vmem:[%s59] sm:$0x1]
    %61 = vrot.lane.b32.xlu0 %v60, 48
    %v62 = vpop.permute.xlu0 %61
    %vm63 = vcmask 458112
    %64 = vst.msk [vmem:[#allocation0] sm:$0x1] %vm63, %v62
    %s65 = scalar_lea.vmem %s0, 5
    %v66 = vld [vmem:[%s65] sm:$0x1]
    %67 = vrot.lane.b32.xlu0 %v66, 40
    %v68 = vpop.permute.xlu0 %67
    %vm69 = vcmask 392512
    %70 = vst.msk [vmem:[#allocation0] sm:$0x1] %vm69, %v68
    %s71 = scalar_lea.vmem %s0, 4
    %v72 = vld [vmem:[%s71] sm:$0x1]
    %73 = vrot.lane.b32.xlu0 %v72, 32
    %v74 = vpop.permute.xlu0 %73
    %vm75 = vcmask 326912
    %76 = vst.msk [vmem:[#allocation0] sm:$0x1] %vm75, %v74
    %s77 = scalar_lea.vmem %s0, 3
    %v78 = vld [vmem:[%s77] sm:$0x1]
    %79 = vrot.lane.b32.xlu0 %v78, 24
    %v80 = vpop.permute.xlu0 %79
    %vm81 = vcmask 261312
    %82 = vst.msk [vmem:[#allocation0] sm:$0x1] %vm81, %v80
    %s83 = scalar_lea.vmem %s0, 2
    %v84 = vld [vmem:[%s83] sm:$0x1]
    %85 = vrot.lane.b32.xlu0 %v84, 16
    %v86 = vpop.permute.xlu0 %85
    %vm87 = vcmask 195712
    %88 = vst.msk [vmem:[#allocation0] sm:$0x1] %vm87, %v86
    %s89 = scalar_lea.vmem %s0, 1
    %v90 = vld [vmem:[%s89] sm:$0x1]
    %91 = vrot.lane.b32.xlu0 %v90, 8
    %v92 = vpop.permute.xlu0 %91
    %vm93 = vcmask 130112
    %94 = vst.msk [vmem:[#allocation0] sm:$0x1] %vm93, %v92
    %s96 = ssub.s32 2, 1
    %v97 = vld [vmem:[#allocation0] sm:%s96]
    %s99 = ssub.s32 2, 1
    %100 = vst [vmem:[%s1] sm:%s99] %v97

// kernel: tile.18
$region0: #{tile.18}
  #allocation0 [shape = 's32[1]{0}', space=sflag, size = 0x4, scoped, tag = 'scoped memory for tile.18']
  %s0 = inlined_call_operand.vmem [shape: f32[4], index: 0, kind: input, shape index: {}]
  %s1 = inlined_call_operand.vmem [shape: f32[32,4], index: 1, kind: output, shape index: {}]
  // Predicated region
  $region2: #{tile.18} parent=0 // pred_check
    _
  $region3: #{tile.18} parent=0 // pred_check_branch
    %3 = sbr.rel (0) target = $region5
  $region4: #{tile.18} parent=0 // pred_region
    _
  $region5: #{tile.18} parent=0 // pred_fallthru
    _
  %v4 = vld [vmem:[%s0] ss:$0 sm:$0xff]
  %5 = vst [vmem:[%s1] sm:$0xff] %v4
  %s6 = scalar_lea.vmem %s1, 8
  %7 = vst [vmem:[%s6] sm:$0xff] %v4
  %s8 = scalar_lea.vmem %s1, 16
  %9 = vst [vmem:[%s8] sm:$0xff] %v4
  %s10 = scalar_lea.vmem %s1, 24
  %11 = vst [vmem:[%s10] sm:$0xff] %v4

// kernel: tile.19
$region0: #{tile.19}
  %s0 = inlined_call_operand.vmem [shape: f32[32,4], index: 0, kind: input, shape index: {}]
  %s1 = inlined_call_operand.vmem [shape: f32[1,128], index: 1, kind: output, shape index: {}]
  $region1: #{tile.19} parent=0
    #allocation0 [shape = 'u8[4096]{0}', space=vmem, size = 0x1000, scoped, tag = 'scoped mem for output reshape']
    %v2 = vld [vmem:[%s0] sm:$0x1]
    %vm3 = vcmask 31744
    %4 = vst.msk [vmem:[#allocation0] sm:$0x1] %vm3, %v2
    %s5 = scalar_lea.vmem %s0, 31
    %v6 = vld [vmem:[%s5] sm:$0x1]
    %7 = vrot.lane.b32.xlu0 %v6, 124
    %v8 = vpop.permute.xlu0 %7
    %vm9 = vcmask 1048544
    %10 = vst.msk [vmem:[#allocation0] sm:$0x1] %vm9, %v8
    %s11 = scalar_lea.vmem %s0, 30
    %v12 = vld [vmem:[%s11] sm:$0x1]
    %13 = vrot.lane.b32.xlu0 %v12, 120
    %v14 = vpop.permute.xlu0 %13
    %vm15 = vcmask 1015744
    %16 = vst.msk [vmem:[#allocation0] sm:$0x1] %vm15, %v14
    %s17 = scalar_lea.vmem %s0, 29
    %v18 = vld [vmem:[%s17] sm:$0x1]
    %19 = vrot.lane.b32.xlu0 %v18, 116
    %v20 = vpop.permute.xlu0 %19
    %vm21 = vcmask 982944
    %22 = vst.msk [vmem:[#allocation0] sm:$0x1] %vm21, %v20
    %s23 = scalar_lea.vmem %s0, 28
    %v24 = vld [vmem:[%s23] sm:$0x1]
    %25 = vrot.lane.b32.xlu0 %v24, 112
    %v26 = vpop.permute.xlu0 %25
    %vm27 = vcmask 950144
    %28 = vst.msk [vmem:[#allocation0] sm:$0x1] %vm27, %v26
    %s29 = scalar_lea.vmem %s0, 27
    %v30 = vld [vmem:[%s29] sm:$0x1]
    %31 = vrot.lane.b32.xlu0 %v30, 108
    %v32 = vpop.permute.xlu0 %31
    %vm33 = vcmask 917344
    %34 = vst.msk [vmem:[#allocation0] sm:$0x1] %vm33, %v32
    %s35 = scalar_lea.vmem %s0, 26
    %v36 = vld [vmem:[%s35] sm:$0x1]
    %37 = vrot.lane.b32.xlu0 %v36, 104
    %v38 = vpop.permute.xlu0 %37
    %vm39 = vcmask 884544
    %40 = vst.msk [vmem:[#allocation0] sm:$0x1] %vm39, %v38
    %s41 = scalar_lea.vmem %s0, 25
    %v42 = vld [vmem:[%s41] sm:$0x1]
    %43 = vrot.lane.b32.xlu0 %v42, 100
    %v44 = vpop.permute.xlu0 %43
    %vm45 = vcmask 851744
    %46 = vst.msk [vmem:[#allocation0] sm:$0x1] %vm45, %v44
    %s47 = scalar_lea.vmem %s0, 24
    %v48 = vld [vmem:[%s47] sm:$0x1]
    %49 = vrot.lane.b32.xlu0 %v48, 96
    %v50 = vpop.permute.xlu0 %49
    %vm51 = vcmask 818944
    %52 = vst.msk [vmem:[#allocation0] sm:$0x1] %vm51, %v50
    %s53 = scalar_lea.vmem %s0, 23
    %v54 = vld [vmem:[%s53] sm:$0x1]
    %55 = vrot.lane.b32.xlu0 %v54, 92
    %v56 = vpop.permute.xlu0 %55
    %vm57 = vcmask 786144
    %58 = vst.msk [vmem:[#allocation0] sm:$0x1] %vm57, %v56
    %s59 = scalar_lea.vmem %s0, 22
    %v60 = vld [vmem:[%s59] sm:$0x1]
    %61 = vrot.lane.b32.xlu0 %v60, 88
    %v62 = vpop.permute.xlu0 %61
    %vm63 = vcmask 753344
    %64 = vst.msk [vmem:[#allocation0] sm:$0x1] %vm63, %v62
    %s65 = scalar_lea.vmem %s0, 21
    %v66 = vld [vmem:[%s65] sm:$0x1]
    %67 = vrot.lane.b32.xlu0 %v66, 84
    %v68 = vpop.permute.xlu0 %67
    %vm69 = vcmask 720544
    %70 = vst.msk [vmem:[#allocation0] sm:$0x1] %vm69, %v68
    %s71 = scalar_lea.vmem %s0, 20
    %v72 = vld [vmem:[%s71] sm:$0x1]
    %73 = vrot.lane.b32.xlu0 %v72, 80
    %v74 = vpop.permute.xlu0 %73
    %vm75 = vcmask 687744
    %76 = vst.msk [vmem:[#allocation0] sm:$0x1] %vm75, %v74
    %s77 = scalar_lea.vmem %s0, 19
    %v78 = vld [vmem:[%s77] sm:$0x1]
    %79 = vrot.lane.b32.xlu0 %v78, 76
    %v80 = vpop.permute.xlu0 %79
    %vm81 = vcmask 654944
    %82 = vst.msk [vmem:[#allocation0] sm:$0x1] %vm81, %v80
    %s83 = scalar_lea.vmem %s0, 18
    %v84 = vld [vmem:[%s83] sm:$0x1]
    %85 = vrot.lane.b32.xlu0 %v84, 72
    %v86 = vpop.permute.xlu0 %85
    %vm87 = vcmask 622144
    %88 = vst.msk [vmem:[#allocation0] sm:$0x1] %vm87, %v86
    %s89 = scalar_lea.vmem %s0, 17
    %v90 = vld [vmem:[%s89] sm:$0x1]
    %91 = vrot.lane.b32.xlu0 %v90, 68
    %v92 = vpop.permute.xlu0 %91
    %vm93 = vcmask 589344
    %94 = vst.msk [vmem:[#allocation0] sm:$0x1] %vm93, %v92
    %s95 = scalar_lea.vmem %s0, 16
    %v96 = vld [vmem:[%s95] sm:$0x1]
    %97 = vrot.lane.b32.xlu0 %v96, 64
    %v98 = vpop.permute.xlu0 %97
    %vm99 = vcmask 556544
    %100 = vst.msk [vmem:[#allocation0] sm:$0x1] %vm99, %v98
    %s101 = scalar_lea.vmem %s0, 15
    %v102 = vld [vmem:[%s101] sm:$0x1]
    %103 = vrot.lane.b32.xlu0 %v102, 60
    %v104 = vpop.permute.xlu0 %103
    %vm105 = vcmask 523744
    %106 = vst.msk [vmem:[#allocation0] sm:$0x1] %vm105, %v104
    %s107 = scalar_lea.vmem %s0, 14
    %v108 = vld [vmem:[%s107] sm:$0x1]
    %109 = vrot.lane.b32.xlu0 %v108, 56
    %v110 = vpop.permute.xlu0 %109
    %vm111 = vcmask 490944
    %112 = vst.msk [vmem:[#allocation0] sm:$0x1] %vm111, %v110
    %s113 = scalar_lea.vmem %s0, 13
    %v114 = vld [vmem:[%s113] sm:$0x1]
    %115 = vrot.lane.b32.xlu0 %v114, 52
    %v116 = vpop.permute.xlu0 %115
    %vm117 = vcmask 458144
    %118 = vst.msk [vmem:[#allocation0] sm:$0x1] %vm117, %v116
    %s119 = scalar_lea.vmem %s0, 12
    %v120 = vld [vmem:[%s119] sm:$0x1]
    %121 = vrot.lane.b32.xlu0 %v120, 48
    %v122 = vpop.permute.xlu0 %121
    %vm123 = vcmask 425344
    %124 = vst.msk [vmem:[#allocation0] sm:$0x1] %vm123, %v122
    %s125 = scalar_lea.vmem %s0, 11
    %v126 = vld [vmem:[%s125] sm:$0x1]
    %127 = vrot.lane.b32.xlu0 %v126, 44
    %v128 = vpop.permute.xlu0 %127
    %vm129 = vcmask 392544
    %130 = vst.msk [vmem:[#allocation0] sm:$0x1] %vm129, %v128
    %s131 = scalar_lea.vmem %s0, 10
    %v132 = vld [vmem:[%s131] sm:$0x1]
    %133 = vrot.lane.b32.xlu0 %v132, 40
    %v134 = vpop.permute.xlu0 %133
    %vm135 = vcmask 359744
    %136 = vst.msk [vmem:[#allocation0] sm:$0x1] %vm135, %v134
    %s137 = scalar_lea.vmem %s0, 9
    %v138 = vld [vmem:[%s137] sm:$0x1]
    %139 = vrot.lane.b32.xlu0 %v138, 36
    %v140 = vpop.permute.xlu0 %139
    %vm141 = vcmask 326944
    %142 = vst.msk [vmem:[#allocation0] sm:$0x1] %vm141, %v140
    %s143 = scalar_lea.vmem %s0, 8
    %v144 = vld [vmem:[%s143] sm:$0x1]
    %145 = vrot.lane.b32.xlu0 %v144, 32
    %v146 = vpop.permute.xlu0 %145
    %vm147 = vcmask 294144
    %148 = vst.msk [vmem:[#allocation0] sm:$0x1] %vm147, %v146
    %s149 = scalar_lea.vmem %s0, 7
    %v150 = vld [vmem:[%s149] sm:$0x1]
    %151 = vrot.lane.b32.xlu0 %v150, 28
    %v152 = vpop.permute.xlu0 %151
    %vm153 = vcmask 261344
    %154 = vst.msk [vmem:[#allocation0] sm:$0x1] %vm153, %v152
    %s155 = scalar_lea.vmem %s0, 6
    %v156 = vld [vmem:[%s155] sm:$0x1]
    %157 = vrot.lane.b32.xlu0 %v156, 24
    %v158 = vpop.permute.xlu0 %157
    %vm159 = vcmask 228544
    %160 = vst.msk [vmem:[#allocation0] sm:$0x1] %vm159, %v158
    %s161 = scalar_lea.vmem %s0, 5
    %v162 = vld [vmem:[%s161] sm:$0x1]
    %163 = vrot.lane.b32.xlu0 %v162, 20
    %v164 = vpop.permute.xlu0 %163
    %vm165 = vcmask 195744
    %166 = vst.msk [vmem:[#allocation0] sm:$0x1] %vm165, %v164
    %s167 = scalar_lea.vmem %s0, 4
    %v168 = vld [vmem:[%s167] sm:$0x1]
    %169 = vrot.lane.b32.xlu0 %v168, 16
    %v170 = vpop.permute.xlu0 %169
    %vm171 = vcmask 162944
    %172 = vst.msk [vmem:[#allocation0] sm:$0x1] %vm171, %v170
    %s173 = scalar_lea.vmem %s0, 3
    %v174 = vld [vmem:[%s173] sm:$0x1]
    %175 = vrot.lane.b32.xlu0 %v174, 12
    %v176 = vpop.permute.xlu0 %175
    %vm177 = vcmask 130144
    %178 = vst.msk [vmem:[#allocation0] sm:$0x1] %vm177, %v176
    %s179 = scalar_lea.vmem %s0, 2
    %v180 = vld [vmem:[%s179] sm:$0x1]
    %181 = vrot.lane.b32.xlu0 %v180, 8
    %v182 = vpop.permute.xlu0 %181
    %vm183 = vcmask 97344
    %184 = vst.msk [vmem:[#allocation0] sm:$0x1] %vm183, %v182
    %s185 = scalar_lea.vmem %s0, 1
    %v186 = vld [vmem:[%s185] sm:$0x1]
    %187 = vrot.lane.b32.xlu0 %v186, 4
    %v188 = vpop.permute.xlu0 %187
    %vm189 = vcmask 64544
    %190 = vst.msk [vmem:[#allocation0] sm:$0x1] %vm189, %v188
    %s192 = ssub.s32 2, 1
    %v193 = vld [vmem:[#allocation0] sm:%s192]
    %s195 = ssub.s32 2, 1
    %196 = vst [vmem:[%s1] sm:%s195] %v193

// kernel: bdp_block_forward.1
$region0: #{bdp_block_forward.1}
  #allocation0 [shape = 'u32[]', space=smem, size = 0x4, offset = 0x4, fixed_abs, tag = 'smem constant byte address 0x4 - core index']
  #allocation1 [shape = 'u32[72,128]{1,0:T(1,128)}', space=vmem, size = 0x9000, scoped, tag = 'internal scratch']
  #allocation2 [shape = 'f32[18,72]{1,0:T(8,128)}', space=vmem, size = 0x3000, scoped, tag = 'scratch operand']
  %s0 = inlined_call_operand.vmem [shape: f32[2,8,32], index: 0, kind: input, shape index: {}]
  %s1 = inlined_call_operand.vmem [shape: f32[2,16,64], index: 1, kind: input, shape index: {}]
  %s2 = inlined_call_operand.vmem [shape: f32[32,128], index: 2, kind: input, shape index: {}]
  %s3 = inlined_call_operand.vmem [shape: f32[1,128], index: 3, kind: input, shape index: {}]
  %s4 = inlined_call_operand.vmem [shape: f32[3,72,128], index: 4, kind: input, shape index: {}]
  %s5 = inlined_call_operand.vmem [shape: f32[2,128], index: 5, kind: input, shape index: {}]
  %s6 = inlined_call_operand.vmem [shape: f32[2,16,128], index: 6, kind: output, shape index: {}]
  %s7 = sld [smem:[#allocation0]]
  $region57: #{bdp_block_forward.1} parent=0
    _
  %s9 = ssub.s32 1, %s7
  %s10 = scalar_select 0, %s9, %s7
  loop: start=0, step=1, limit=4
  $region2: #{bdp_block_forward.1} parent=0 // loop_pre_header
    _
  $region3: #{bdp_block_forward.1} parent=0 // loop_header
    %s12 = sphi 0, %s16
    %p13 = scmp.ge.s32.totalorder %s12, 4
    %s22 = sphi 0, %s24
    %s25 = sphi 0, %s22
    %s26 = sphi 0, %s25
    %s42 = sphi 0, %s26
    %s48 = sphi 0, %s50
    %s51 = sphi 0, %s48
    %s52 = sphi 0, %s51
    %s68 = sphi 0, %s52
    %s72 = sphi 0, %s72
    %s74 = sphi 0, %s72
    %s75 = sphi 0, %s74
    %s89 = sphi 0, %s75
    %s93 = sphi 0, %s93
    %s95 = sphi 0, %s93
    %s96 = sphi 0, %s95
    %s110 = sphi 0, %s96
    %s114 = sphi 0, %s114
    %s116 = sphi 0, %s114
    %s117 = sphi 0, %s116
    %s131 = sphi 0, %s117
    %s135 = sphi 0, %s135
    %s137 = sphi 0, %s135
    %s138 = sphi 0, %s137
    %s152 = sphi 0, %s138
    %s158 = sphi 0, %s160
    %s161 = sphi 0, %s158
    %s162 = sphi 0, %s161
    %s178 = sphi 0, %s162
  $region4: #{bdp_block_forward.1} parent=0 // loop_header_branch
    %15 = sbr.rel (%p13) target = $region8
  $region5: #{bdp_block_forward.1} parent=0 // loop_body
    %s17 = ssub.s32 %s12, 1
    %s18 = ssub.s32 %s12, 2
    %s19 = sadd.s32 %s12, 1
    %s20 = ssub.s32 %s12, %s19
    %p21 = scmp.eq.s32.totalorder %s20, 0
    %s23 = sadd.s32 %s22, 1
    %s24 = scalar_select %p21, %s22, %s23
    %p27 = pneg %p21
    %p28 = scmp.eq.s32.totalorder %s12, 1
    %p29 = por %p27, %p28
    %p30 = scmp.ne.s32.totalorder %s22, %s25
    %p31 = scmp.eq.s32.totalorder %s12, 0
    %p32 = por %p30, %p31
    %p33 = scmp.ne.s32.totalorder %s22, %s25
    %p34 = scmp.eq.s32.totalorder %s17, 1
    %p35 = por %p33, %p34
    %p36 = scmp.ne.s32.totalorder %s25, %s26
    %p37 = scmp.eq.s32.totalorder %s17, 0
    %p38 = por %p36, %p37
    %p39 = scmp.ne.s32.totalorder %s25, %s26
    %p40 = scmp.eq.s32.totalorder %s18, 1
    %p41 = por %p39, %p40
    %p43 = scmp.ne.s32.totalorder %s26, %s42
    %p44 = scmp.eq.s32.totalorder %s18, 0
    %p45 = por %p43, %p44
    %s46 = ssub.s32 %s12, %s19
    %p47 = scmp.eq.s32.totalorder %s46, 0
    %s49 = sadd.s32 %s48, 1
    %s50 = scalar_select %p47, %s48, %s49
    %p53 = pneg %p47
    %p54 = scmp.eq.s32.totalorder %s12, 1
    %p55 = por %p53, %p54
    %p56 = scmp.ne.s32.totalorder %s48, %s51
    %p57 = scmp.eq.s32.totalorder %s12, 0
    %p58 = por %p56, %p57
    %p59 = scmp.ne.s32.totalorder %s48, %s51
    %p60 = scmp.eq.s32.totalorder %s17, 1
    %p61 = por %p59, %p60
    %p62 = scmp.ne.s32.totalorder %s51, %s52
    %p63 = scmp.eq.s32.totalorder %s17, 0
    %p64 = por %p62, %p63
    %p65 = scmp.ne.s32.totalorder %s51, %s52
    %p66 = scmp.eq.s32.totalorder %s18, 1
    %p67 = por %p65, %p66
    %p69 = scmp.ne.s32.totalorder %s52, %s68
    %p70 = scmp.eq.s32.totalorder %s18, 0
    %p71 = por %p69, %p70
    %s73 = sadd.s32 %s72, 1
    %p76 = scmp.eq.s32.totalorder %s12, 1
    %p77 = scmp.ne.s32.totalorder %s72, %s74
    %p78 = scmp.eq.s32.totalorder %s12, 0
    %p79 = por %p77, %p78
    %p80 = scmp.ne.s32.totalorder %s72, %s74
    %p81 = scmp.eq.s32.totalorder %s17, 1
    %p82 = por %p80, %p81
    %p83 = scmp.ne.s32.totalorder %s74, %s75
    %p84 = scmp.eq.s32.totalorder %s17, 0
    %p85 = por %p83, %p84
    %p86 = scmp.ne.s32.totalorder %s74, %s75
    %p87 = scmp.eq.s32.totalorder %s18, 1
    %p88 = por %p86, %p87
    %p90 = scmp.ne.s32.totalorder %s75, %s89
    %p91 = scmp.eq.s32.totalorder %s18, 0
    %p92 = por %p90, %p91
    %s94 = sadd.s32 %s93, 1
    %p97 = scmp.eq.s32.totalorder %s12, 1
    %p98 = scmp.ne.s32.totalorder %s93, %s95
    %p99 = scmp.eq.s32.totalorder %s12, 0
    %p100 = por %p98, %p99
    %p101 = scmp.ne.s32.totalorder %s93, %s95
    %p102 = scmp.eq.s32.totalorder %s17, 1
    %p103 = por %p101, %p102
    %p104 = scmp.ne.s32.totalorder %s95, %s96
    %p105 = scmp.eq.s32.totalorder %s17, 0
    %p106 = por %p104, %p105
    %p107 = scmp.ne.s32.totalorder %s95, %s96
    %p108 = scmp.eq.s32.totalorder %s18, 1
    %p109 = por %p107, %p108
    %p111 = scmp.ne.s32.totalorder %s96, %s110
    %p112 = scmp.eq.s32.totalorder %s18, 0
    %p113 = por %p111, %p112
    %s115 = sadd.s32 %s114, 1
    %p118 = scmp.eq.s32.totalorder %s12, 1
    %p119 = scmp.ne.s32.totalorder %s114, %s116
    %p120 = scmp.eq.s32.totalorder %s12, 0
    %p121 = por %p119, %p120
    %p122 = scmp.ne.s32.totalorder %s114, %s116
    %p123 = scmp.eq.s32.totalorder %s17, 1
    %p124 = por %p122, %p123
    %p125 = scmp.ne.s32.totalorder %s116, %s117
    %p126 = scmp.eq.s32.totalorder %s17, 0
    %p127 = por %p125, %p126
    %p128 = scmp.ne.s32.totalorder %s116, %s117
    %p129 = scmp.eq.s32.totalorder %s18, 1
    %p130 = por %p128, %p129
    %p132 = scmp.ne.s32.totalorder %s117, %s131
    %p133 = scmp.eq.s32.totalorder %s18, 0
    %p134 = por %p132, %p133
    %s136 = sadd.s32 %s135, 1
    %p139 = scmp.eq.s32.totalorder %s12, 1
    %p140 = scmp.ne.s32.totalorder %s135, %s137
    %p141 = scmp.eq.s32.totalorder %s12, 0
    %p142 = por %p140, %p141
    %p143 = scmp.ne.s32.totalorder %s135, %s137
    %p144 = scmp.eq.s32.totalorder %s17, 1
    %p145 = por %p143, %p144
    %p146 = scmp.ne.s32.totalorder %s137, %s138
    %p147 = scmp.eq.s32.totalorder %s17, 0
    %p148 = por %p146, %p147
    %p149 = scmp.ne.s32.totalorder %s137, %s138
    %p150 = scmp.eq.s32.totalorder %s18, 1
    %p151 = por %p149, %p150
    %p153 = scmp.ne.s32.totalorder %s138, %s152
    %p154 = scmp.eq.s32.totalorder %s18, 0
    %p155 = por %p153, %p154
    %s156 = ssub.s32 %s12, %s19
    %p157 = scmp.eq.s32.totalorder %s156, 0
    %s159 = sadd.s32 %s158, 1
    %s160 = scalar_select %p157, %s158, %s159
    %p163 = pneg %p157
    %p164 = scmp.eq.s32.totalorder %s12, 1
    %p165 = por %p163, %p164
    %p166 = scmp.ne.s32.totalorder %s158, %s161
    %p167 = scmp.eq.s32.totalorder %s12, 0
    %p168 = por %p166, %p167
    %p169 = scmp.ne.s32.totalorder %s158, %s161
    %p170 = scmp.eq.s32.totalorder %s17, 1
    %p171 = por %p169, %p170
    %p172 = scmp.ne.s32.totalorder %s161, %s162
    %p173 = scmp.eq.s32.totalorder %s17, 0
    %p174 = por %p172, %p173
    %p175 = scmp.ne.s32.totalorder %s161, %s162
    %p176 = scmp.eq.s32.totalorder %s18, 1
    %p177 = por %p175, %p176
    %p179 = scmp.ne.s32.totalorder %s162, %s178
    %p180 = scmp.eq.s32.totalorder %s18, 0
    %p181 = por %p179, %p180
    %p182 = scmp.le.s32.totalorder 1, %s12
    %p183 = scmp.lt.s32.totalorder %s12, 3
    %p184 = pnand %p182, %p183
    %p185 = pneg %p184
    // Predicated region
    $region9: #{bdp_block_forward.1} parent=5 // pred_check
      _
    $region10: #{bdp_block_forward.1} parent=5 // pred_check_branch
      %187 = sbr.rel (%p184) target = $region12
    $region11: #{bdp_block_forward.1} parent=5 // pred_region
      %s188 = ssub.s32 %s12, 1
      // Predicated region
      $region13: #{bdp_block_forward.1} parent=11 // pred_check
        %p189 = pneg %p85
      $region14: #{bdp_block_forward.1} parent=11 // pred_check_branch
        %191 = sbr.rel (%p189) target = $region16
      $region15: #{bdp_block_forward.1} parent=11 // pred_region
        _
      $region16: #{bdp_block_forward.1} parent=11 // pred_fallthru
        _
      // Predicated region
      $region17: #{bdp_block_forward.1} parent=11 // pred_check
        %p192 = pneg %p106
      $region18: #{bdp_block_forward.1} parent=11 // pred_check_branch
        %194 = sbr.rel (%p192) target = $region20
      $region19: #{bdp_block_forward.1} parent=11 // pred_region
        _
      $region20: #{bdp_block_forward.1} parent=11 // pred_fallthru
        _
      // Predicated region
      $region21: #{bdp_block_forward.1} parent=11 // pred_check
        %p195 = pneg %p127
      $region22: #{bdp_block_forward.1} parent=11 // pred_check_branch
        %197 = sbr.rel (%p195) target = $region24
      $region23: #{bdp_block_forward.1} parent=11 // pred_region
        _
      $region24: #{bdp_block_forward.1} parent=11 // pred_fallthru
        _
      // Predicated region
      $region25: #{bdp_block_forward.1} parent=11 // pred_check
        %p198 = pneg %p148
      $region26: #{bdp_block_forward.1} parent=11 // pred_check_branch
        %200 = sbr.rel (%p198) target = $region28
      $region27: #{bdp_block_forward.1} parent=11 // pred_region
        _
      $region28: #{bdp_block_forward.1} parent=11 // pred_fallthru
        _
    $region12: #{bdp_block_forward.1} parent=5 // pred_fallthru
      _
    %p201 = scmp.lt.s32.totalorder %s12, 2
    // Predicated region
    $region29: #{bdp_block_forward.1} parent=5 // pred_check
      %p202 = pneg %p201
    $region30: #{bdp_block_forward.1} parent=5 // pred_check_branch
      %204 = sbr.rel (%p202) target = $region32
    $region31: #{bdp_block_forward.1} parent=5 // pred_region
      // Predicated region
      $region33: #{bdp_block_forward.1} parent=31 // pred_check
        %p205 = pneg %p32
      $region34: #{bdp_block_forward.1} parent=31 // pred_check_branch
        %207 = sbr.rel (%p205) target = $region36
      $region35: #{bdp_block_forward.1} parent=31 // pred_region
        %p208 = scmp.lt.s32.totalorder %s12, 1
        %s209 = scalar_select %p208, %s12, 1
        %s210 = smul.addr %s209, 8
        %s211 = scalar_lea.vmem %s0, %s210
      $region36: #{bdp_block_forward.1} parent=31 // pred_fallthru
        _
      // Predicated region
      $region37: #{bdp_block_forward.1} parent=31 // pred_check
        %p212 = pneg %p58
      $region38: #{bdp_block_forward.1} parent=31 // pred_check_branch
        %214 = sbr.rel (%p212) target = $region40
      $region39: #{bdp_block_forward.1} parent=31 // pred_region
        %p215 = scmp.lt.s32.totalorder %s12, 1
        %s216 = scalar_select %p215, %s12, 1
        %s217 = smul.addr %s216, 2
        %s218 = smul.addr %s217, 8
        %s219 = scalar_lea.vmem %s1, %s218
      $region40: #{bdp_block_forward.1} parent=31 // pred_fallthru
        _
    $region32: #{bdp_block_forward.1} parent=5 // pred_fallthru
      _
    %p220 = scmp.le.s32.totalorder 1, %s12
    %p221 = scmp.lt.s32.totalorder %s12, 3
    %p222 = pnand %p220, %p221
    %p223 = pneg %p222
    // Predicated region
    $region41: #{bdp_block_forward.1} parent=5 // pred_check
      _
    $region42: #{bdp_block_forward.1} parent=5 // pred_check_branch
      %225 = sbr.rel (%p222) target = $region44
    $region43: #{bdp_block_forward.1} parent=5 // pred_region
      %s226 = ssub.s32 %s12, 1
      %p227 = scmp.lt.s32.totalorder %s17, 1
      %s228 = scalar_select %p227, %s17, 1
      %s229 = smul.addr %s228, 8
      %s230 = scalar_lea.vmem %s0, %s229
      %p231 = pneg %p38
      %p232 = pneg %p35
      %p233 = scmp.lt.s32.totalorder %s17, 1
      %s234 = scalar_select %p233, %s17, 1
      %s235 = smul.addr %s234, 2
      %s236 = smul.addr %s235, 8
      %s237 = scalar_lea.vmem %s1, %s236
      %p238 = pneg %p64
      %p239 = pneg %p61
      %p240 = pneg %p85
      %p241 = pneg %p82
      %p242 = pneg %p106
      %p243 = pneg %p103
      %p244 = pneg %p127
      %p245 = pneg %p124
      %p246 = pneg %p148
      %p247 = pneg %p145
      %p248 = pneg %p174
      %p249 = pneg %p171
      %p250 = scmp.lt.s32.totalorder %s17, 1
      %s251 = scalar_select %p250, %s17, 1
      %s252 = smul.addr %s251, 2
      %s253 = smul.addr %s252, 8
      %s254 = scalar_lea.vmem %s6, %s253
      %p255 = scmp.lt.s32.totalorder %s17, 1
      %s256 = scalar_select %p255, %s17, 1
      %s257 = smul.addr %s256, 8
      %s258 = scalar_lea.vmem %s0, %s257
      %p259 = scmp.lt.s32.totalorder %s17, 1
      %s260 = scalar_select %p259, %s17, 1
      %s261 = smul.addr %s260, 2
      %s262 = smul.addr %s261, 8
      %s263 = scalar_lea.vmem %s1, %s262
      %p264 = scmp.lt.s32.totalorder %s17, 1
      %s265 = scalar_select %p264, %s17, 1
      %s266 = smul.addr %s265, 2
      %s267 = smul.addr %s266, 8
      %s268 = scalar_lea.vmem %s6, %s267
      %v269 = vld [vmem:[%s258] sm:$0xff]
      %v270 = vld [vmem:[%s2] sm:$0xff]
      %v271 = vld [vmem:[%s2 + $0x8] sm:$0xff]
      %v272 = vld [vmem:[%s2 + $0x10] sm:$0xff]
      %v273 = vld [vmem:[%s2 + $0x18] sm:$0xff]
      %v274 = vld [vmem:[%s3] sm:$0x1]
      %v276 = vperm.slane %v274, 0
      %vm278 = vcmask 261120
      %v280 = vsel %vm278, %v269, 0
      %282 = vmatpush.msra.mxu0 0.0
      %283 = vmatpush.msra.mxu0 0.0
      %284 = vmatpush.msra.mxu0 0.0
      %285 = vmatpush.msra.mxu0 0.0
      %286 = vmatpush.msra.mxu0 0.0
      %287 = vmatpush.msra.mxu0 0.0
      %288 = vmatpush.msra.mxu0 0.0
      %289 = vmatpush.msra.mxu0 0.0
      %290 = vmatpush.msra.mxu0 0.0
      %291 = vmatpush.msra.mxu0 0.0
      %292 = vmatpush.msra.mxu0 0.0
      %293 = vmatpush.msra.mxu0 0.0
      %294 = vmatpush.msra.mxu0 %v273
      %295 = vmatpush.msra.mxu0 %v272
      %296 = vmatpush.msra.mxu0 %v271
      %297 = vmatpush.msra.mxu0 %v270
      %298 = vmatmul.f32.gmra.mxu0 %v280
      %v299 = vpop.f32.mrf.mxu0
      %v300 = vadd.f32 %v276, %v299
      %301 = vdwg.mxu0
      %vm302 = vcmask 588800
      %303 = vst.msk [vmem:[#allocation2] sm:$0xff] %vm302, 0.0
      %304 = vst.msk [vmem:[#allocation2 + $0x8] sm:$0xff] %vm302, 0.0
      %vm305 = vcmask 582656
      %306 = vst.msk [vmem:[#allocation2 + $0x10] sm:$0x3] %vm305, 0.0
      %308 = vrot.lane.b32.xlu0 %v300, 4
      %v309 = vpop.permute.xlu0 %308
      %vm311 = vcmask 548896
      %312 = vst.msk [vmem:[#allocation2 + $0x1] sm:$0x1] %vm311, %v309
      %313 = vrot.lane.b32.xlu0 %v300, 68
      %v314 = vpop.permute.xlu0 %313
      %316 = vst.msk [vmem:[#allocation2 + $0x2] sm:$0x1] %vm311, %v314
      %vm317 = vcmask 549921
      %318 = vst.msk [vmem:[#allocation2 + $0x2] sm:$0x2] %vm317, %v309
      %319 = vst.msk [vmem:[#allocation2 + $0x3] sm:$0x2] %vm317, %v314
      %vm320 = vcmask 550946
      %321 = vst.msk [vmem:[#allocation2 + $0x3] sm:$0x4] %vm320, %v309
      %322 = vst.msk [vmem:[#allocation2 + $0x4] sm:$0x4] %vm320, %v314
      %vm323 = vcmask 551971
      %324 = vst.msk [vmem:[#allocation2 + $0x4] sm:$0x8] %vm323, %v309
      %325 = vst.msk [vmem:[#allocation2 + $0x5] sm:$0x8] %vm323, %v314
      %vm326 = vcmask 552996
      %327 = vst.msk [vmem:[#allocation2 + $0x5] sm:$0x10] %vm326, %v309
      %328 = vst.msk [vmem:[#allocation2 + $0x6] sm:$0x10] %vm326, %v314
      %vm329 = vcmask 554021
      %330 = vst.msk [vmem:[#allocation2 + $0x6] sm:$0x20] %vm329, %v309
      %331 = vst.msk [vmem:[#allocation2 + $0x7] sm:$0x20] %vm329, %v314
      %vm332 = vcmask 555046
      %333 = vst.msk [vmem:[#allocation2 + $0x7] sm:$0x40] %vm332, %v309
      %334 = vst.msk [vmem:[#allocation2 + $0x8] sm:$0x40] %vm332, %v314
      %vm335 = vcmask 556071
      %336 = vst.msk [vmem:[#allocation2 + $0x8] sm:$0x80] %vm335, %v309
      %337 = vst.msk [vmem:[#allocation2 + $0x9] sm:$0x80] %vm335, %v314
      %v338 = vld [vmem:[#allocation2 + $0x1] sm:$0xff]
      %v339 = vld [vmem:[#allocation2 + $0x9] sm:$0xff]
      %v340 = vld [vmem:[%s263] sm:$0xff]
      %v341 = vld [vmem:[%s263 + $0x8] sm:$0xff]
      %344 = vrot.lane.b32.xlu0 %v340, 4
      %v345 = vpop.permute.xlu0 %344
      %346 = vrot.lane.b32.xlu0 %v341, 4
      %v347 = vpop.permute.xlu0 %346
      %v350 = vadd.f32 %v338, %v345
      %v351 = vadd.f32 %v339, %v347
      %vm352 = vcmask 556064
      %353 = vst.msk [vmem:[#allocation2 + $0x1] sm:$0xff] %vm352, %v350
      %354 = vst.msk [vmem:[#allocation2 + $0x9] sm:$0xff] %vm352, %v351
      %v355 = vld [vmem:[#allocation2] sm:$0xff]
      %v356 = vld [vmem:[#allocation2 + $0x8] sm:$0xff]
      %v357 = vld [vmem:[%s4] sm:$0xff]
      %v358 = vld [vmem:[%s4 + $0x8] sm:$0xff]
      %v359 = vld [vmem:[%s4 + $0x10] sm:$0xff]
      %v360 = vld [vmem:[%s4 + $0x18] sm:$0xff]
      %v361 = vld [vmem:[%s4 + $0x20] sm:$0xff]
      %v362 = vld [vmem:[%s4 + $0x28] sm:$0xff]
      %v363 = vld [vmem:[%s4 + $0x30] sm:$0xff]
      %v364 = vld [vmem:[%s4 + $0x38] sm:$0xff]
      %v365 = vld [vmem:[%s4 + $0x40] sm:$0xff]
      %v366 = vld [vmem:[#allocation2 + $0x1] sm:$0xff]
      %v367 = vld [vmem:[#allocation2 + $0x9] sm:$0xff]
      %s368 = scalar_lea.vmem %s4, 72
      %v369 = vld [vmem:[%s368] sm:$0xff]
      %v370 = vld [vmem:[%s368 + $0x8] sm:$0xff]
      %v371 = vld [vmem:[%s368 + $0x10] sm:$0xff]
      %v372 = vld [vmem:[%s368 + $0x18] sm:$0xff]
      %v373 = vld [vmem:[%s368 + $0x20] sm:$0xff]
      %v374 = vld [vmem:[%s368 + $0x28] sm:$0xff]
      %v375 = vld [vmem:[%s368 + $0x30] sm:$0xff]
      %v376 = vld [vmem:[%s368 + $0x38] sm:$0xff]
      %v377 = vld [vmem:[%s368 + $0x40] sm:$0xff]
      %v379 = vsel %vm302, %v366, 0
      %v382 = vsel %vm302, %v367, 0
      %384 = vmatpush.msra.mxu0 0.0
      %385 = vmatpush.msra.mxu0 0.0
      %386 = vmatpush.msra.mxu0 0.0
      %387 = vmatpush.msra.mxu0 0.0
      %388 = vmatpush.msra.mxu0 0.0
      %389 = vmatpush.msra.mxu0 0.0
      %390 = vmatpush.msra.mxu0 0.0
      %391 = vmatpush.msra.mxu0 %v377
      %392 = vmatpush.msra.mxu0 %v376
      %393 = vmatpush.msra.mxu0 %v375
      %394 = vmatpush.msra.mxu0 %v374
      %395 = vmatpush.msra.mxu0 %v373
      %396 = vmatpush.msra.mxu0 %v372
      %397 = vmatpush.msra.mxu0 %v371
      %398 = vmatpush.msra.mxu0 %v370
      %399 = vmatpush.msra.mxu0 %v369
      %400 = vmatmul.f32.gmra.mxu0 %v379
      %v401 = vpop.f32.mrf.mxu0
      %v402 = vadd.f32 0.0, %v401
      %403 = vmatmul.f32.gmra.mxu0 %v382
      %v404 = vpop.f32.mrf.mxu0
      %v405 = vadd.f32 0.0, %v404
      %406 = vdwg.mxu0
      %v408 = vsel %vm302, %v355, 0
      %v411 = vsel %vm302, %v356, 0
      %413 = vmatpush.msra.mxu0 0.0
      %414 = vmatpush.msra.mxu0 0.0
      %415 = vmatpush.msra.mxu0 0.0
      %416 = vmatpush.msra.mxu0 0.0
      %417 = vmatpush.msra.mxu0 0.0
      %418 = vmatpush.msra.mxu0 0.0
      %419 = vmatpush.msra.mxu0 0.0
      %420 = vmatpush.msra.mxu0 %v365
      %421 = vmatpush.msra.mxu0 %v364
      %422 = vmatpush.msra.mxu0 %v363
      %423 = vmatpush.msra.mxu0 %v362
      %424 = vmatpush.msra.mxu0 %v361
      %425 = vmatpush.msra.mxu0 %v360
      %426 = vmatpush.msra.mxu0 %v359
      %427 = vmatpush.msra.mxu0 %v358
      %428 = vmatpush.msra.mxu0 %v357
      %429 = vmatmul.f32.gmra.mxu0 %v408
      %v430 = vpop.f32.mrf.mxu0
      %v431 = vadd.f32 %v402, %v430
      %432 = vmatmul.f32.gmra.mxu0 %v411
      %v433 = vpop.f32.mrf.mxu0
      %v434 = vadd.f32 %v405, %v433
      %435 = vdwg.mxu0
      %v436 = vld [vmem:[#allocation2 + $0x2] sm:$0xff]
      %v437 = vld [vmem:[#allocation2 + $0xa] sm:$0xff]
      %s438 = scalar_lea.vmem %s4, 144
      %v439 = vld [vmem:[%s438] sm:$0xff]
      %v440 = vld [vmem:[%s438 + $0x8] sm:$0xff]
      %v441 = vld [vmem:[%s438 + $0x10] sm:$0xff]
      %v442 = vld [vmem:[%s438 + $0x18] sm:$0xff]
      %v443 = vld [vmem:[%s438 + $0x20] sm:$0xff]
      %v444 = vld [vmem:[%s438 + $0x28] sm:$0xff]
      %v445 = vld [vmem:[%s438 + $0x30] sm:$0xff]
      %v446 = vld [vmem:[%s438 + $0x38] sm:$0xff]
      %v447 = vld [vmem:[%s438 + $0x40] sm:$0xff]
      %v449 = vsel %vm302, %v436, 0
      %v452 = vsel %vm302, %v437, 0
      %454 = vmatpush.msra.mxu0 0.0
      %455 = vmatpush.msra.mxu0 0.0
      %456 = vmatpush.msra.mxu0 0.0
      %457 = vmatpush.msra.mxu0 0.0
      %458 = vmatpush.msra.mxu0 0.0
      %459 = vmatpush.msra.mxu0 0.0
      %460 = vmatpush.msra.mxu0 0.0
      %461 = vmatpush.msra.mxu0 %v447
      %462 = vmatpush.msra.mxu0 %v446
      %463 = vmatpush.msra.mxu0 %v445
      %464 = vmatpush.msra.mxu0 %v444
      %465 = vmatpush.msra.mxu0 %v443
      %466 = vmatpush.msra.mxu0 %v442
      %467 = vmatpush.msra.mxu0 %v441
      %468 = vmatpush.msra.mxu0 %v440
      %469 = vmatpush.msra.mxu0 %v439
      %470 = vmatmul.f32.gmra.mxu0 %v449
      %v471 = vpop.f32.mrf.mxu0
      %v472 = vadd.f32 0.0, %v471
      %473 = vmatmul.f32.gmra.mxu0 %v452
      %v474 = vpop.f32.mrf.mxu0
      %v475 = vadd.f32 0.0, %v474
      %476 = vdwg.mxu0
      %v477 = vadd.f32 %v431, %v472
      %v478 = vadd.f32 %v434, %v475
      %v479 = vld [vmem:[%s5] sm:$0x1]
      %v480 = vperm.slane %v479, 0
      %v481 = vmul.f32 %v477, %v480
      %v482 = vmul.f32 %v478, %v480
      %v483 = vld [vmem:[%s5 + $0x1] sm:$0x1]
      %v484 = vperm.slane %v483, 0
      %v485 = vadd.f32 %v481, %v484
      %v486 = vadd.f32 %v482, %v484
      %v487 = vmax.f32 %v485, 0.0
      %v488 = vmax.f32 %v486, 0.0
      %489 = vst [vmem:[%s268] sm:$0xff] %v487
      %490 = vst [vmem:[%s268 + $0x8] sm:$0xff] %v488
      %p491 = scmp.lt.s32.totalorder %s17, 1
      %s492 = scalar_select %p491, %s17, 1
      %s493 = smul.addr %s492, 2
      %s494 = smul.addr %s493, 8
      %s495 = scalar_lea.vmem %s6, %s494
      // Predicated region
      $region45: #{bdp_block_forward.1} parent=43 // pred_check
        %p496 = pneg %p171
      $region46: #{bdp_block_forward.1} parent=43 // pred_check_branch
        %498 = sbr.rel (%p496) target = $region48
      $region47: #{bdp_block_forward.1} parent=43 // pred_region
        _
      $region48: #{bdp_block_forward.1} parent=43 // pred_fallthru
        _
    $region44: #{bdp_block_forward.1} parent=5 // pred_fallthru
      _
    %p499 = scmp.le.s32.totalorder 2, %s12
    // Predicated region
    $region49: #{bdp_block_forward.1} parent=5 // pred_check
      %p500 = pneg %p499
    $region50: #{bdp_block_forward.1} parent=5 // pred_check_branch
      %502 = sbr.rel (%p500) target = $region52
    $region51: #{bdp_block_forward.1} parent=5 // pred_region
      %s503 = ssub.s32 %s12, 2
      // Predicated region
      $region53: #{bdp_block_forward.1} parent=51 // pred_check
        %p504 = pneg %p177
      $region54: #{bdp_block_forward.1} parent=51 // pred_check_branch
        %506 = sbr.rel (%p504) target = $region56
      $region55: #{bdp_block_forward.1} parent=51 // pred_region
        %p507 = scmp.lt.s32.totalorder %s18, 1
        %s508 = scalar_select %p507, %s18, 1
        %s509 = smul.addr %s508, 2
        %s510 = smul.addr %s509, 8
        %s511 = scalar_lea.vmem %s6, %s510
      $region56: #{bdp_block_forward.1} parent=51 // pred_fallthru
        _
    $region52: #{bdp_block_forward.1} parent=5 // pred_fallthru
      _
  $region6: #{bdp_block_forward.1} parent=0 // loop_footer
    %s16 = sadd.s32 1, %s12
  $region7: #{bdp_block_forward.1} parent=0 // loop_footer_branch
    %11 = sbr.rel target = $region3
  $region8: #{bdp_block_forward.1} parent=0 // loop_exit
    _

</llo_original>
